<compile_context>
chip_gen: v6e
topology: v6e:2x2x1
jax: 0.10.0
libtpu: 0.0.40
codegen_flags: <defaults>
</compile_context>

<pallas_src>
import jax
import jax.numpy as jnp
from jax.experimental import pallas as pl
from jax.experimental.pallas import tpu as pltpu


def _round_up(x, m):
    return (x + m - 1) // m * m


def policy_mlp_kernel(x_ref, w1_ref, b1_ref, w2_ref, b2_ref, w3_ref, b3_ref, o_ref):
    """One (bm, input_dims) batch tile of the 3-layer MLP."""
    x = x_ref[...]
    w1, w2, w3 = w1_ref[...], w2_ref[...], w3_ref[...]
    b1, b2, b3 = b1_ref[...], b2_ref[...], b3_ref[...]
    # MXU matmuls accumulate in f32; bias add + relu stay f32 on the VPU
    # (v5e has no bf16 VPU path).  Weights/x may be bf16 on v6e/v7x.
    h1 = jnp.maximum(jnp.dot(x, w1, preferred_element_type=jnp.float32) + b1, 0.0)
    h2 = jnp.maximum(
        jnp.dot(h1.astype(w2.dtype), w2, preferred_element_type=jnp.float32) + b2,
        0.0)
    logits = jnp.dot(h2.astype(w3.dtype), w3, preferred_element_type=jnp.float32) + b3
    # Note: a downstream log-softmax / action sample over the few real lanes
    # could be fused here, but the reference module returns raw logits.
    o_ref[...] = logits.astype(o_ref.dtype)


def _select_bm(B, bm_requested, sublane):
    """Pick the batch tile.

    * as large as requested (>=512 keeps per-step overhead amortized),
    * never larger than the (sublane-rounded) batch (tiny acting batches),
    * capped at ~ceil(B/2) so the grid keeps >= 2 "parallel" steps and a
      2-TC chip (v7x) can split the batch across both TensorCores,
    * always a multiple of `sublane` (8 for f32 blocks, 16 for bf16 x blocks).
    """
    bm = min(
        _round_up(bm_requested, sublane),
        _round_up(B, sublane),
        max(_round_up(pl.cdiv(B, 2), sublane), sublane),
    )
    return max(bm, sublane)


def policy_network_forward(x, kernel_params, *, bm=512):
    """x: (B, input_dims).  Returns logits (B, output_dims) in f32."""
    w1, b1 = kernel_params["w1"], kernel_params["b1"]
    w2, b2 = kernel_params["w2"], kernel_params["b2"]
    w3, b3 = kernel_params["w3"], kernel_params["b3"]
    w_dtype = w1.dtype

    B, in_dims = x.shape
    assert w1.shape[0] == in_dims
    out_dims = w3.shape[1]

    sublane = 16 if w_dtype == jnp.bfloat16 else 8
    bm = _select_bm(B, bm, sublane)
    grid_b = pl.cdiv(B, bm)
    B_pad = grid_b * bm

    # Feed x at its natural feature width; only pad the batch dim (tiny copy of
    # a (B_pad, in_dims) array) when B doesn't divide the tile.
    x_in = x.astype(w_dtype)
    if B_pad != B:
        x_in = jnp.zeros((B_pad, in_dims), w_dtype).at[:B].set(x_in)

    def resident(shape):
        # Same block index every grid step -> DMA'd once, stays resident in VMEM.
        return pl.BlockSpec(shape, lambda i: (0,) * len(shape))

    out = pl.pallas_call(
        policy_mlp_kernel,
        out_shape=jax.ShapeDtypeStruct((B_pad, out_dims), jnp.float32),
        grid=(grid_b,),
        in_specs=[
            pl.BlockSpec((bm, in_dims), lambda i: (i, 0)),   # x: tiled over batch
            resident(w1.shape), resident(b1.shape),
            resident(w2.shape), resident(b2.shape),
            resident(w3.shape), resident(b3.shape),
        ],
        # Natural-width output: 4 f32 per row (contiguous in HBM), not 128 lanes.
        out_specs=pl.BlockSpec((bm, out_dims), lambda i: (i, 0)),
        compiler_params=pltpu.CompilerParams(
            dimension_semantics=("parallel",)),              # v7x: 2 TCs share grid
    )(x_in, w1, b1, w2, b2, w3, b3)

    return out[:B] if B_pad != B else out


def init_params(key, input_dims, fc1_dims, fc2_dims, output_dims):
    """PyTorch nn.Linear-style init (uniform +/- 1/sqrt(fan_in)), stored as
    (fan_in, fan_out) so the kernel computes x @ W + b == torch's x @ W.T + b.
    No feature padding anywhere."""
    ks = jax.random.split(key, 6)

    def linear(kw, kb, fan_in, fan_out):
        bound = 1.0 / jnp.sqrt(jnp.float32(fan_in))
        w = jax.random.uniform(kw, (fan_in, fan_out), jnp.float32, -bound, bound)
        b = jax.random.uniform(kb, (1, fan_out), jnp.float32, -bound, bound)
        return w, b

    w1, b1 = linear(ks[0], ks[1], input_dims, fc1_dims)
    w2, b2 = linear(ks[2], ks[3], fc1_dims, fc2_dims)
    w3, b3 = linear(ks[4], ks[5], fc2_dims, output_dims)
    return dict(w1=w1, b1=b1, w2=w2, b2=b2, w3=w3, b3=b3)


def make_kernel_params(params, *, weight_dtype=jnp.float32):
    """Kernel-layout params.  weight_dtype=bf16 halves weight/x HBM bytes on
    v6e/v7x (bf16-native MXU, f32 accumulation); biases stay f32 because the
    bias add / relu run on the VPU in f32 (no bf16 VPU on v5e)."""
    out = dict(params)
    for k in ("w1", "w2", "w3"):
        out[k] = params[k].astype(weight_dtype)
    return out


if __name__ == "__main__":
    # CartPole/LunarLander-like: obs dim 8, two 32-wide hidden layers, 4 actions.
    input_dims, fc1_dims, fc2_dims, output_dims = 8, 32, 32, 4

    key = jax.random.PRNGKey(0)
    k_params, k_x1, k_x2 = jax.random.split(key, 3)
    params = init_params(k_params, input_dims, fc1_dims, fc2_dims, output_dims)

    def ref_forward(x):
        h1 = jnp.maximum(x @ params["w1"] + params["b1"], 0.0)
        h2 = jnp.maximum(h1 @ params["w2"] + params["b2"], 0.0)
        return h2 @ params["w3"] + params["b3"]

    f32_params = make_kernel_params(params)                              # exact path
    bf16_params = make_kernel_params(params, weight_dtype=jnp.bfloat16)  # v6e/v7x

    # 1) Small acting batch: bm clamps to the batch, grid of 1, no padding.
    x_small = jax.random.normal(k_x1, (8, input_dims), dtype=jnp.float32)
    logits_small = policy_network_forward(x_small, f32_params)
    jax.block_until_ready(logits_small)
    assert logits_small.shape == (8, output_dims)
    assert jnp.allclose(logits_small, ref_forward(x_small), atol=1e-5, rtol=1e-5)

    # 2) Training-sized minibatch whose size doesn't divide the tile: bm is
    #    capped at ~B/2 so the grid has 2 "parallel" steps (both v7x TCs busy).
    x_big = jax.random.normal(k_x2, (300, input_dims), dtype=jnp.float32)
    logits_big = policy_network_forward(x_big, f32_params)
    jax.block_until_ready(logits_big)
    assert logits_big.shape == (300, output_dims)
    assert jnp.allclose(logits_big, ref_forward(x_big), atol=1e-5, rtol=1e-5)

    # 3) bf16-operand path (v6e/v7x HBM-traffic win); f32 accumulate + f32 VPU.
    logits_bf16 = policy_network_forward(x_big, bf16_params)
    jax.block_until_ready(logits_bf16)
    assert logits_bf16.shape == (300, output_dims)
    assert jnp.allclose(logits_bf16, ref_forward(x_big), atol=7.5e-2, rtol=7.5e-2)

    print("KERNEL_OK")
</pallas_src>

<mosaic_0001>
module attributes {stable_mosaic.version = 11 : i64} {
  func.func @policy_mlp_kernel(%arg0: i32, %arg1: memref<8x8xf32, #tpu.memory_space<vmem>>, %arg2: memref<8x32xf32, #tpu.memory_space<vmem>>, %arg3: memref<1x32xf32, #tpu.memory_space<vmem>>, %arg4: memref<32x32xf32, #tpu.memory_space<vmem>>, %arg5: memref<1x32xf32, #tpu.memory_space<vmem>>, %arg6: memref<32x4xf32, #tpu.memory_space<vmem>>, %arg7: memref<1x4xf32, #tpu.memory_space<vmem>>, %arg8: memref<8x4xf32, #tpu.memory_space<vmem>>) attributes {dimension_semantics = [#tpu.dimension_semantics<parallel>], iteration_bounds = array<i64: 1>, scalar_prefetch = 0 : i64, scratch_operands = 0 : i64, tpu.core_type = #tpu.core_type<tc>, window_params = [{transform_indices = @transform_0, window_bounds = array<i64: 8, 8>}, {pipeline_mode = #tpu.pipeline_mode<synchronous>, transform_indices = @transform_1, window_bounds = array<i64: 8, 32>}, {pipeline_mode = #tpu.pipeline_mode<synchronous>, transform_indices = @transform_2, window_bounds = array<i64: 1, 32>}, {pipeline_mode = #tpu.pipeline_mode<synchronous>, transform_indices = @transform_3, window_bounds = array<i64: 32, 32>}, {pipeline_mode = #tpu.pipeline_mode<synchronous>, transform_indices = @transform_4, window_bounds = array<i64: 1, 32>}, {pipeline_mode = #tpu.pipeline_mode<synchronous>, transform_indices = @transform_5, window_bounds = array<i64: 32, 4>}, {pipeline_mode = #tpu.pipeline_mode<synchronous>, transform_indices = @transform_6, window_bounds = array<i64: 1, 4>}, {transform_indices = @transform_7, window_bounds = array<i64: 8, 4>}]} {
    %c0 = arith.constant 0 : index
    %c0_0 = arith.constant 0 : index
    %0 = vector.load %arg1[%c0, %c0_0] : memref<8x8xf32, #tpu.memory_space<vmem>>, vector<8x8xf32>
    %c0_1 = arith.constant 0 : index
    %c0_2 = arith.constant 0 : index
    %1 = vector.load %arg2[%c0_1, %c0_2] : memref<8x32xf32, #tpu.memory_space<vmem>>, vector<8x32xf32>
    %c0_3 = arith.constant 0 : index
    %c0_4 = arith.constant 0 : index
    %2 = vector.load %arg4[%c0_3, %c0_4] : memref<32x32xf32, #tpu.memory_space<vmem>>, vector<32x32xf32>
    %c0_5 = arith.constant 0 : index
    %c0_6 = arith.constant 0 : index
    %3 = vector.load %arg6[%c0_5, %c0_6] : memref<32x4xf32, #tpu.memory_space<vmem>>, vector<32x4xf32>
    %c0_7 = arith.constant 0 : index
    %c0_8 = arith.constant 0 : index
    %4 = vector.load %arg3[%c0_7, %c0_8] : memref<1x32xf32, #tpu.memory_space<vmem>>, vector<1x32xf32>
    %c0_9 = arith.constant 0 : index
    %c0_10 = arith.constant 0 : index
    %5 = vector.load %arg5[%c0_9, %c0_10] : memref<1x32xf32, #tpu.memory_space<vmem>>, vector<1x32xf32>
    %c0_11 = arith.constant 0 : index
    %c0_12 = arith.constant 0 : index
    %6 = vector.load %arg7[%c0_11, %c0_12] : memref<1x4xf32, #tpu.memory_space<vmem>>, vector<1x4xf32>
    %cst = arith.constant dense<0.000000e+00> : vector<8x32xf32>
    %7 = tpu.matmul %0, %1, %cst {dimension_numbers = #tpu.dot_dimension_numbers<[1], [0], [0], [1], [0, 0, 1, 1], [], []>} : vector<8x8xf32>, vector<8x32xf32>, vector<8x32xf32> -> vector<8x32xf32>
    %8 = vector.broadcast %4 : vector<1x32xf32> to vector<8x32xf32>
    %9 = arith.addf %7, %8 : vector<8x32xf32>
    %cst_13 = arith.constant 0.000000e+00 : f32
    %10 = vector.broadcast %cst_13 : f32 to vector<8x32xf32>
    %11 = arith.maximumf %9, %10 : vector<8x32xf32>
    %cst_14 = arith.constant dense<0.000000e+00> : vector<8x32xf32>
    %12 = tpu.matmul %11, %2, %cst_14 {dimension_numbers = #tpu.dot_dimension_numbers<[1], [0], [0], [1], [0, 0, 1, 1], [], []>} : vector<8x32xf32>, vector<32x32xf32>, vector<8x32xf32> -> vector<8x32xf32>
    %13 = vector.broadcast %5 : vector<1x32xf32> to vector<8x32xf32>
    %14 = arith.addf %12, %13 : vector<8x32xf32>
    %cst_15 = arith.constant 0.000000e+00 : f32
    %15 = vector.broadcast %cst_15 : f32 to vector<8x32xf32>
    %16 = arith.maximumf %14, %15 : vector<8x32xf32>
    %cst_16 = arith.constant dense<0.000000e+00> : vector<8x4xf32>
    %17 = tpu.matmul %16, %3, %cst_16 {dimension_numbers = #tpu.dot_dimension_numbers<[1], [0], [0], [1], [0, 0, 1, 1], [], []>} : vector<8x32xf32>, vector<32x4xf32>, vector<8x4xf32> -> vector<8x4xf32>
    %18 = vector.broadcast %6 : vector<1x4xf32> to vector<8x4xf32>
    %19 = arith.addf %17, %18 : vector<8x4xf32>
    %c0_17 = arith.constant 0 : index
    %c0_18 = arith.constant 0 : index
    %20 = vector.load %arg8[%c0_17, %c0_18] : memref<8x4xf32, #tpu.memory_space<vmem>>, vector<8x4xf32>
    tpu.vector_store %arg8[%c0_17, %c0_18], %19 {strides = array<i32>} : memref<8x4xf32, #tpu.memory_space<vmem>>, vector<8x4xf32>,
    return
  }
  func.func @transform_0(%arg0: i32) -> (i32, i32) {
    %c0_i32 = arith.constant 0 : i32
    %c0_i32_0 = arith.constant 0 : i32
    return %arg0, %c0_i32 : i32, i32
  }
  func.func @transform_1(%arg0: i32) -> (i32, i32) {
    %c0_i32 = arith.constant 0 : i32
    %c0_i32_0 = arith.constant 0 : i32
    %c0_i32_1 = arith.constant 0 : i32
    return %c0_i32, %c0_i32_0 : i32, i32
  }
  func.func @transform_2(%arg0: i32) -> (i32, i32) {
    %c0_i32 = arith.constant 0 : i32
    %c0_i32_0 = arith.constant 0 : i32
    %c0_i32_1 = arith.constant 0 : i32
    return %c0_i32, %c0_i32_0 : i32, i32
  }
  func.func @transform_3(%arg0: i32) -> (i32, i32) {
    %c0_i32 = arith.constant 0 : i32
    %c0_i32_0 = arith.constant 0 : i32
    %c0_i32_1 = arith.constant 0 : i32
    return %c0_i32, %c0_i32_0 : i32, i32
  }
  func.func @transform_4(%arg0: i32) -> (i32, i32) {
    %c0_i32 = arith.constant 0 : i32
    %c0_i32_0 = arith.constant 0 : i32
    %c0_i32_1 = arith.constant 0 : i32
    return %c0_i32, %c0_i32_0 : i32, i32
  }
  func.func @transform_5(%arg0: i32) -> (i32, i32) {
    %c0_i32 = arith.constant 0 : i32
    %c0_i32_0 = arith.constant 0 : i32
    %c0_i32_1 = arith.constant 0 : i32
    return %c0_i32, %c0_i32_0 : i32, i32
  }
  func.func @transform_6(%arg0: i32) -> (i32, i32) {
    %c0_i32 = arith.constant 0 : i32
    %c0_i32_0 = arith.constant 0 : i32
    %c0_i32_1 = arith.constant 0 : i32
    return %c0_i32, %c0_i32_0 : i32, i32
  }
  func.func @transform_7(%arg0: i32) -> (i32, i32) {
    %c0_i32 = arith.constant 0 : i32
    %c0_i32_0 = arith.constant 0 : i32
    return %arg0, %c0_i32 : i32, i32
  }
}

</mosaic_0001>

<llo_original>
// kernel: tpu_custom_call.1
$region0: #{tpu_custom_call.1}
  #allocation0 [shape = 'u32[]', space=smem, size = 0x4, offset = 0x4, fixed_abs, tag = 'smem constant byte address 0x4 - core index']
  #allocation1 [shape = 'u32[144,128]{1,0:T(1,128)}', space=vmem, size = 0x12000, scoped, tag = 'internal scratch']
  %s0 = inlined_call_operand.vmem [shape: f32[8,8], index: 0, kind: input, shape index: {}]
  %s1 = inlined_call_operand.hbm [shape: f32[8,32], index: 1, kind: input, shape index: {}]
  %s2 = inlined_call_operand.vmem [shape: f32[1,32], index: 2, kind: input, shape index: {}]
  %s3 = inlined_call_operand.vmem [shape: f32[32,32], index: 3, kind: input, shape index: {}]
  %s4 = inlined_call_operand.hbm [shape: f32[1,32], index: 4, kind: input, shape index: {}]
  %s5 = inlined_call_operand.vmem [shape: f32[32,4], index: 5, kind: input, shape index: {}]
  %s6 = inlined_call_operand.vmem [shape: f32[1,4], index: 6, kind: input, shape index: {}]
  %s7 = inlined_call_operand.vmem [shape: f32[8,4], index: 7, kind: output, shape index: {}]
  %s8 = sld [smem:[#allocation0]]
  $region46: #{tpu_custom_call.1} parent=0
    _
  %s10 = ssub.s32 1, %s8
  %s11 = scalar_select 0, %s10, %s8
  $region1: #{tpu_custom_call.1} parent=0
    #allocation2 [shape = 'u8[4096]{0}', space=vmem, size = 0x1000, scoped, tag = 'input window, operand 1, single buffered']
    #allocation3 [shape = 's32[1]{0}', space=sflag, size = 0x4, scoped, tag = 'scoped memory for tpu_custom_call.1']
    #allocation4 [shape = 'u8[512]{0}', space=vmem, size = 0x400, scoped, tag = 'input window, operand 4, single buffered']
    #allocation5 [shape = 's32[1]{0}', space=sflag, size = 0x4, scoped, tag = 'scoped memory for tpu_custom_call.1']
    %12 = vsyncpa [#allocation3], 0
    %13 = vsyncpa [#allocation5], 0
    // Predicated region
    $region2: #{tpu_custom_call.1} parent=1 // pred_check
      _
    $region3: #{tpu_custom_call.1} parent=1 // pred_check_branch
      %15 = sbr.rel (0) target = $region5
    $region4: #{tpu_custom_call.1} parent=1 // pred_region
      _
    $region5: #{tpu_custom_call.1} parent=1 // pred_fallthru
      _
    // Predicated region
    $region6: #{tpu_custom_call.1} parent=1 // pred_check
      _
    $region7: #{tpu_custom_call.1} parent=1 // pred_check_branch
      %17 = sbr.rel (0) target = $region9
    $region8: #{tpu_custom_call.1} parent=1 // pred_region
      %s19 = ssub.s32 128, 128
      %20 = vsyncadd [#allocation3], %s19
      %s22 = sshll.u32 [#allocation2], 4
      %s23 = int_to_ptr.vmem [resolvable:$true] %s22
      %25 = dma.hbm_to_vmem [thread:$0]  %s1, 128, %s23, [#allocation3]
    $region9: #{tpu_custom_call.1} parent=1 // pred_fallthru
      _
    // Predicated region
    $region10: #{tpu_custom_call.1} parent=1 // pred_check
      _
    $region11: #{tpu_custom_call.1} parent=1 // pred_check_branch
      %27 = sbr.rel (0) target = $region13
    $region12: #{tpu_custom_call.1} parent=1 // pred_region
      _
    $region13: #{tpu_custom_call.1} parent=1 // pred_fallthru
      _
    // Predicated region
    $region14: #{tpu_custom_call.1} parent=1 // pred_check
      _
    $region15: #{tpu_custom_call.1} parent=1 // pred_check_branch
      %29 = sbr.rel (0) target = $region17
    $region16: #{tpu_custom_call.1} parent=1 // pred_region
      _
    $region17: #{tpu_custom_call.1} parent=1 // pred_fallthru
      _
    // Predicated region
    $region18: #{tpu_custom_call.1} parent=1 // pred_check
      _
    $region19: #{tpu_custom_call.1} parent=1 // pred_check_branch
      %31 = sbr.rel (0) target = $region21
    $region20: #{tpu_custom_call.1} parent=1 // pred_region
      %s33 = ssub.s32 16, 16
      %34 = vsyncadd [#allocation5], %s33
      %s36 = sshll.u32 [#allocation4], 4
      %s37 = int_to_ptr.vmem [resolvable:$true] %s36
      %39 = dma.hbm_to_vmem [thread:$0]  %s4, 16, %s37, [#allocation5]
    $region21: #{tpu_custom_call.1} parent=1 // pred_fallthru
      _
    // Predicated region
    $region22: #{tpu_custom_call.1} parent=1 // pred_check
      _
    $region23: #{tpu_custom_call.1} parent=1 // pred_check_branch
      %41 = sbr.rel (0) target = $region25
    $region24: #{tpu_custom_call.1} parent=1 // pred_region
      _
    $region25: #{tpu_custom_call.1} parent=1 // pred_fallthru
      _
    // Predicated region
    $region26: #{tpu_custom_call.1} parent=1 // pred_check
      _
    $region27: #{tpu_custom_call.1} parent=1 // pred_check_branch
      %43 = sbr.rel (0) target = $region29
    $region28: #{tpu_custom_call.1} parent=1 // pred_region
      _
    $region29: #{tpu_custom_call.1} parent=1 // pred_fallthru
      _
    // Predicated region
    $region30: #{tpu_custom_call.1} parent=1 // pred_check
      _
    $region31: #{tpu_custom_call.1} parent=1 // pred_check_branch
      %45 = sbr.rel (0) target = $region33
    $region32: #{tpu_custom_call.1} parent=1 // pred_region
      %46 = dma.done [#allocation3], 128
    $region33: #{tpu_custom_call.1} parent=1 // pred_fallthru
      _
    // Predicated region
    $region34: #{tpu_custom_call.1} parent=1 // pred_check
      _
    $region35: #{tpu_custom_call.1} parent=1 // pred_check_branch
      %48 = sbr.rel (0) target = $region37
    $region36: #{tpu_custom_call.1} parent=1 // pred_region
      %49 = dma.done [#allocation5], 16
    $region37: #{tpu_custom_call.1} parent=1 // pred_fallthru
      _
    %v50 = vld [vmem:[%s0] sm:$0xff]
    %v51 = vld [vmem:[#allocation2] sm:$0xff]
    %v52 = vld [vmem:[%s3] sm:$0xff]
    %v53 = vld [vmem:[%s3 + $0x8] sm:$0xff]
    %v54 = vld [vmem:[%s3 + $0x10] sm:$0xff]
    %v55 = vld [vmem:[%s3 + $0x18] sm:$0xff]
    %v56 = vld [vmem:[%s5] sm:$0xff]
    %v57 = vld [vmem:[%s5 + $0x8] sm:$0xff]
    %v58 = vld [vmem:[%s5 + $0x10] sm:$0xff]
    %v59 = vld [vmem:[%s5 + $0x18] sm:$0xff]
    %v60 = vld [vmem:[%s2] sm:$0x1]
    %v61 = vld [vmem:[#allocation4] sm:$0x1]
    %v62 = vld [vmem:[%s6] sm:$0x1]
    %v64 = vlaneseq
    %v65 = vshrl.u32 %v64, 7
    %v66 = vsub.s32 0, %v65
    %v67 = vrot.slane %v60, %v66
    %vm69 = vcmask 64512
    %v71 = vsel %vm69, %v50, 0
    %73 = vmatprep.subr.mxu0 0.0
    %74 = vmatpush1.msra.mxu0 0.0
    %75 = vmatprep.subr.mxu0 0.0
    %76 = vmatpush1.msra.mxu0 0.0
    %77 = vmatprep.subr.mxu0 0.0
    %78 = vmatpush1.msra.mxu0 0.0
    %79 = vmatprep.subr.mxu0 0.0
    %80 = vmatpush1.msra.mxu0 0.0
    %81 = vmatprep.subr.mxu0 0.0
    %82 = vmatpush1.msra.mxu0 0.0
    %83 = vmatprep.subr.mxu0 0.0
    %84 = vmatpush1.msra.mxu0 0.0
    %85 = vmatprep.subr.mxu0 0.0
    %86 = vmatpush1.msra.mxu0 0.0
    %87 = vmatprep.subr.mxu0 0.0
    %88 = vmatpush1.msra.mxu0 0.0
    %89 = vmatprep.subr.mxu0 0.0
    %90 = vmatpush1.msra.mxu0 0.0
    %91 = vmatprep.subr.mxu0 0.0
    %92 = vmatpush1.msra.mxu0 0.0
    %93 = vmatprep.subr.mxu0 0.0
    %94 = vmatpush1.msra.mxu0 0.0
    %95 = vmatprep.subr.mxu0 0.0
    %96 = vmatpush1.msra.mxu0 0.0
    %97 = vmatprep.subr.mxu0 0.0
    %98 = vmatpush1.msra.mxu0 0.0
    %99 = vmatprep.subr.mxu0 0.0
    %100 = vmatpush1.msra.mxu0 0.0
    %101 = vmatprep.subr.mxu0 0.0
    %102 = vmatpush1.msra.mxu0 0.0
    %103 = vmatprep.subr.mxu0 0.0
    %104 = vmatpush1.msra.mxu0 %v51
    %105 = vmatprep.subr.mxu0 0.0
    %106 = vmatpush2.msra.mxu0 0.0
    %107 = vmatprep.subr.mxu0 0.0
    %108 = vmatpush2.msra.mxu0 0.0
    %109 = vmatprep.subr.mxu0 0.0
    %110 = vmatpush2.msra.mxu0 0.0
    %111 = vmatprep.subr.mxu0 0.0
    %112 = vmatpush2.msra.mxu0 0.0
    %113 = vmatprep.subr.mxu0 0.0
    %114 = vmatpush2.msra.mxu0 0.0
    %115 = vmatprep.subr.mxu0 0.0
    %116 = vmatpush2.msra.mxu0 0.0
    %117 = vmatprep.subr.mxu0 0.0
    %118 = vmatpush2.msra.mxu0 0.0
    %119 = vmatprep.subr.mxu0 0.0
    %120 = vmatpush2.msra.mxu0 0.0
    %121 = vmatprep.subr.mxu0 0.0
    %122 = vmatpush2.msra.mxu0 0.0
    %123 = vmatprep.subr.mxu0 0.0
    %124 = vmatpush2.msra.mxu0 0.0
    %125 = vmatprep.subr.mxu0 0.0
    %126 = vmatpush2.msra.mxu0 0.0
    %127 = vmatprep.subr.mxu0 0.0
    %128 = vmatpush2.msra.mxu0 0.0
    %129 = vmatprep.subr.mxu0 0.0
    %130 = vmatpush2.msra.mxu0 0.0
    %131 = vmatprep.subr.mxu0 0.0
    %132 = vmatpush2.msra.mxu0 0.0
    %133 = vmatprep.subr.mxu0 0.0
    %134 = vmatpush2.msra.mxu0 0.0
    %135 = vmatprep.subr.mxu0 0.0
    %136 = vmatpush2.msra.mxu0 0.0
    %137 = vmatprep.mubr.f32.mxu0 0.0
    %138 = vmatmul.mubr.f32.gmra.mxu0 %v71
    %v139 = vpop.f32.mrf.mxu0
    %v140 = vadd.f32 %v67, %v139
    %v141 = vpop.f32.mrf.mxu0
    %142 = vdwg.mxu0
    %v143 = vmax.f32 %v140, 0.0
    %v145 = vlaneseq
    %v146 = vshrl.u32 %v145, 7
    %v147 = vsub.s32 0, %v146
    %v148 = vrot.slane %v61, %v147
    %vm150 = vcmask 261120
    %v152 = vsel %vm150, %v143, 0
    %154 = vmatprep.subr.mxu0 0.0
    %155 = vmatpush1.msra.mxu0 0.0
    %156 = vmatprep.subr.mxu0 0.0
    %157 = vmatpush1.msra.mxu0 0.0
    %158 = vmatprep.subr.mxu0 0.0
    %159 = vmatpush1.msra.mxu0 0.0
    %160 = vmatprep.subr.mxu0 0.0
    %161 = vmatpush1.msra.mxu0 0.0
    %162 = vmatprep.subr.mxu0 0.0
    %163 = vmatpush1.msra.mxu0 0.0
    %164 = vmatprep.subr.mxu0 0.0
    %165 = vmatpush1.msra.mxu0 0.0
    %166 = vmatprep.subr.mxu0 0.0
    %167 = vmatpush1.msra.mxu0 0.0
    %168 = vmatprep.subr.mxu0 0.0
    %169 = vmatpush1.msra.mxu0 0.0
    %170 = vmatprep.subr.mxu0 0.0
    %171 = vmatpush1.msra.mxu0 0.0
    %172 = vmatprep.subr.mxu0 0.0
    %173 = vmatpush1.msra.mxu0 0.0
    %174 = vmatprep.subr.mxu0 0.0
    %175 = vmatpush1.msra.mxu0 0.0
    %176 = vmatprep.subr.mxu0 0.0
    %177 = vmatpush1.msra.mxu0 0.0
    %178 = vmatprep.subr.mxu0 0.0
    %179 = vmatpush1.msra.mxu0 %v55
    %180 = vmatprep.subr.mxu0 0.0
    %181 = vmatpush1.msra.mxu0 %v54
    %182 = vmatprep.subr.mxu0 0.0
    %183 = vmatpush1.msra.mxu0 %v53
    %184 = vmatprep.subr.mxu0 0.0
    %185 = vmatpush1.msra.mxu0 %v52
    %186 = vmatprep.subr.mxu0 0.0
    %187 = vmatpush2.msra.mxu0 0.0
    %188 = vmatprep.subr.mxu0 0.0
    %189 = vmatpush2.msra.mxu0 0.0
    %190 = vmatprep.subr.mxu0 0.0
    %191 = vmatpush2.msra.mxu0 0.0
    %192 = vmatprep.subr.mxu0 0.0
    %193 = vmatpush2.msra.mxu0 0.0
    %194 = vmatprep.subr.mxu0 0.0
    %195 = vmatpush2.msra.mxu0 0.0
    %196 = vmatprep.subr.mxu0 0.0
    %197 = vmatpush2.msra.mxu0 0.0
    %198 = vmatprep.subr.mxu0 0.0
    %199 = vmatpush2.msra.mxu0 0.0
    %200 = vmatprep.subr.mxu0 0.0
    %201 = vmatpush2.msra.mxu0 0.0
    %202 = vmatprep.subr.mxu0 0.0
    %203 = vmatpush2.msra.mxu0 0.0
    %204 = vmatprep.subr.mxu0 0.0
    %205 = vmatpush2.msra.mxu0 0.0
    %206 = vmatprep.subr.mxu0 0.0
    %207 = vmatpush2.msra.mxu0 0.0
    %208 = vmatprep.subr.mxu0 0.0
    %209 = vmatpush2.msra.mxu0 0.0
    %210 = vmatprep.subr.mxu0 0.0
    %211 = vmatpush2.msra.mxu0 0.0
    %212 = vmatprep.subr.mxu0 0.0
    %213 = vmatpush2.msra.mxu0 0.0
    %214 = vmatprep.subr.mxu0 0.0
    %215 = vmatpush2.msra.mxu0 0.0
    %216 = vmatprep.subr.mxu0 0.0
    %217 = vmatpush2.msra.mxu0 0.0
    %218 = vmatprep.mubr.f32.mxu0 0.0
    %219 = vmatmul.mubr.f32.gmra.mxu0 %v152
    %v220 = vpop.f32.mrf.mxu0
    %v221 = vadd.f32 %v148, %v220
    %v222 = vpop.f32.mrf.mxu0
    %223 = vdwg.mxu0
    %v224 = vmax.f32 %v221, 0.0
    %v226 = vlaneseq
    %v227 = vshrl.u32 %v226, 7
    %v228 = vsub.s32 0, %v227
    %v229 = vrot.slane %v62, %v228
    %v232 = vsel %vm150, %v224, 0
    %234 = vmatprep.subr.mxu0 0.0
    %235 = vmatpush1.msra.mxu0 0.0
    %236 = vmatprep.subr.mxu0 0.0
    %237 = vmatpush1.msra.mxu0 0.0
    %238 = vmatprep.subr.mxu0 0.0
    %239 = vmatpush1.msra.mxu0 0.0
    %240 = vmatprep.subr.mxu0 0.0
    %241 = vmatpush1.msra.mxu0 0.0
    %242 = vmatprep.subr.mxu0 0.0
    %243 = vmatpush1.msra.mxu0 0.0
    %244 = vmatprep.subr.mxu0 0.0
    %245 = vmatpush1.msra.mxu0 0.0
    %246 = vmatprep.subr.mxu0 0.0
    %247 = vmatpush1.msra.mxu0 0.0
    %248 = vmatprep.subr.mxu0 0.0
    %249 = vmatpush1.msra.mxu0 0.0
    %250 = vmatprep.subr.mxu0 0.0
    %251 = vmatpush1.msra.mxu0 0.0
    %252 = vmatprep.subr.mxu0 0.0
    %253 = vmatpush1.msra.mxu0 0.0
    %254 = vmatprep.subr.mxu0 0.0
    %255 = vmatpush1.msra.mxu0 0.0
    %256 = vmatprep.subr.mxu0 0.0
    %257 = vmatpush1.msra.mxu0 0.0
    %258 = vmatprep.subr.mxu0 0.0
    %259 = vmatpush1.msra.mxu0 %v59
    %260 = vmatprep.subr.mxu0 0.0
    %261 = vmatpush1.msra.mxu0 %v58
    %262 = vmatprep.subr.mxu0 0.0
    %263 = vmatpush1.msra.mxu0 %v57
    %264 = vmatprep.subr.mxu0 0.0
    %265 = vmatpush1.msra.mxu0 %v56
    %266 = vmatprep.subr.mxu0 0.0
    %267 = vmatpush2.msra.mxu0 0.0
    %268 = vmatprep.subr.mxu0 0.0
    %269 = vmatpush2.msra.mxu0 0.0
    %270 = vmatprep.subr.mxu0 0.0
    %271 = vmatpush2.msra.mxu0 0.0
    %272 = vmatprep.subr.mxu0 0.0
    %273 = vmatpush2.msra.mxu0 0.0
    %274 = vmatprep.subr.mxu0 0.0
    %275 = vmatpush2.msra.mxu0 0.0
    %276 = vmatprep.subr.mxu0 0.0
    %277 = vmatpush2.msra.mxu0 0.0
    %278 = vmatprep.subr.mxu0 0.0
    %279 = vmatpush2.msra.mxu0 0.0
    %280 = vmatprep.subr.mxu0 0.0
    %281 = vmatpush2.msra.mxu0 0.0
    %282 = vmatprep.subr.mxu0 0.0
    %283 = vmatpush2.msra.mxu0 0.0
    %284 = vmatprep.subr.mxu0 0.0
    %285 = vmatpush2.msra.mxu0 0.0
    %286 = vmatprep.subr.mxu0 0.0
    %287 = vmatpush2.msra.mxu0 0.0
    %288 = vmatprep.subr.mxu0 0.0
    %289 = vmatpush2.msra.mxu0 0.0
    %290 = vmatprep.subr.mxu0 0.0
    %291 = vmatpush2.msra.mxu0 0.0
    %292 = vmatprep.subr.mxu0 0.0
    %293 = vmatpush2.msra.mxu0 0.0
    %294 = vmatprep.subr.mxu0 0.0
    %295 = vmatpush2.msra.mxu0 0.0
    %296 = vmatprep.subr.mxu0 0.0
    %297 = vmatpush2.msra.mxu0 0.0
    %298 = vmatprep.mubr.f32.mxu0 0.0
    %299 = vmatmul.mubr.f32.gmra.mxu0 %v232
    %v300 = vpop.f32.mrf.mxu0
    %v301 = vadd.f32 %v229, %v300
    %v302 = vpop.f32.mrf.mxu0
    %303 = vdwg.mxu0
    %vm304 = vcmask 31744
    %305 = vst.msk [vmem:[%s7] sm:$0xff] %vm304, %v301
    // Predicated region
    $region38: #{tpu_custom_call.1} parent=1 // pred_check
      _
    $region39: #{tpu_custom_call.1} parent=1 // pred_check_branch
      %307 = sbr.rel (0) target = $region41
    $region40: #{tpu_custom_call.1} parent=1 // pred_region
      _
    $region41: #{tpu_custom_call.1} parent=1 // pred_fallthru
      _
    // Predicated region
    $region42: #{tpu_custom_call.1} parent=1 // pred_check
      _
    $region43: #{tpu_custom_call.1} parent=1 // pred_check_branch
      %309 = sbr.rel (0) target = $region45
    $region44: #{tpu_custom_call.1} parent=1 // pred_region
      _
    $region45: #{tpu_custom_call.1} parent=1 // pred_fallthru
      _
    %310 = vsyncpa [#allocation3], 1
    %311 = vsyncpa [#allocation5], 1

</llo_original>
